<compile_context>
chip_gen: v6e
topology: v6e:2x2x1
jax: 0.10.0
libtpu: 0.0.40
codegen_flags: <defaults>
</compile_context>

<pallas_src>
import jax
import jax.numpy as jnp
from jax.experimental import pallas as pl
from jax.experimental.pallas import tpu as pltpu


# ----------------------------------------------------------------------------
# Kernel: elementwise Mish on one (TM, LANES) tile
# ----------------------------------------------------------------------------
def _mish_kernel(x_ref, o_ref):
    x = x_ref[...].astype(jnp.float32)
    u = jnp.exp(-jnp.abs(x))                      # 1 EUP transcendental
    u2 = u * u
    pos = x >= 0.0
    num = jnp.where(pos, 1.0 + 2.0 * u, u2 + 2.0 * u)
    den = num + jnp.where(pos, 2.0 * u2, 2.0)     # den in (1, 5]: NR is safe
    r = pl.reciprocal(den, approx=True)           # EUP vrcp (approx)
    r = r * (2.0 - den * r)                       # one Newton step -> ~f32 accuracy
    o_ref[...] = (x * num * r).astype(o_ref.dtype)


# ----------------------------------------------------------------------------
# Wrapper: flatten -> lane-dense (rows, LANES) -> tiled pallas_call -> reshape
# ----------------------------------------------------------------------------
def mish(x, *, tile_rows=256, lanes=512):
    orig_shape = x.shape
    orig_dtype = x.dtype
    n = x.size
    flat = x.reshape(-1)

    # Rows needed at `lanes` lane width; pick a row tile that is a multiple of 8
    # and no larger than what the input needs, then pad rows to a tile multiple.
    rows_needed = -(-n // lanes)
    tm = min(tile_rows, max(8, ((rows_needed + 7) // 8) * 8))
    rows = ((rows_needed + tm - 1) // tm) * tm
    padded = rows * lanes
    if padded != n:
        flat = jnp.pad(flat, (0, padded - n))     # mish(0) == 0, padding is inert
    x2d = flat.reshape(rows, lanes)

    itemsize = jnp.dtype(orig_dtype).itemsize
    out2d = pl.pallas_call(
        _mish_kernel,
        out_shape=jax.ShapeDtypeStruct((rows, lanes), orig_dtype),
        grid=(rows // tm,),
        in_specs=[pl.BlockSpec((tm, lanes), lambda i: (i, 0))],
        out_specs=pl.BlockSpec((tm, lanes), lambda i: (i, 0)),
        compiler_params=pltpu.CompilerParams(
            dimension_semantics=("parallel",),
            vmem_limit_bytes=64 * 1024 * 1024,
        ),
        cost_estimate=pl.CostEstimate(
            flops=10 * padded,                    # VPU: abs/where/mul/add/NR
            transcendentals=2 * padded,           # exp + reciprocal
            bytes_accessed=2 * padded * itemsize,
        ),
    )(x2d)

    return out2d.reshape(-1)[:n].reshape(orig_shape)


# ----------------------------------------------------------------------------
# Pure-jnp reference (numerically stable softplus)
# ----------------------------------------------------------------------------
def _mish_ref(x):
    sp = jnp.maximum(x, 0.0) + jnp.log1p(jnp.exp(-jnp.abs(x)))
    return x * jnp.tanh(sp)


if __name__ == "__main__":
    mish_jit = jax.jit(mish)

    # Small input matching the module's typical 4-D activation layout.
    key = jax.random.PRNGKey(0)
    x = jax.random.normal(key, (2, 4, 16, 16), jnp.float32)
    out = jax.block_until_ready(mish_jit(x))
    assert out.shape == x.shape, out.shape
    assert jnp.allclose(out, _mish_ref(x), atol=1e-4, rtol=1e-4)

    # Larger input: exercises the multi-tile pipelined grid and large-|x| path.
    x_big = 3.0 * jax.random.normal(jax.random.PRNGKey(1), (4, 64, 32, 32),
                                    jnp.float32)
    out_big = jax.block_until_ready(mish_jit(x_big))
    assert jnp.allclose(out_big, _mish_ref(x_big), atol=1e-4, rtol=1e-4)

    # Extreme magnitudes: overflow-safety of the exp(-|x|) formulation.
    x_ext = jnp.linspace(-40.0, 40.0, 2048, dtype=jnp.float32).reshape(2, 4, 16, 16)
    out_ext = jax.block_until_ready(mish_jit(x_ext))
    assert jnp.all(jnp.isfinite(out_ext))
    assert jnp.allclose(out_ext, _mish_ref(x_ext), atol=1e-4, rtol=1e-4)

    print("KERNEL_OK")
</pallas_src>

<mosaic_0001>
module attributes {stable_mosaic.version = 11 : i64} {
  func.func @_mish_kernel(%arg0: i32, %arg1: memref<8x512xf32, #tpu.memory_space<vmem>>, %arg2: memref<8x512xf32, #tpu.memory_space<vmem>>) attributes {dimension_semantics = [#tpu.dimension_semantics<parallel>], iteration_bounds = array<i64: 1>, scalar_prefetch = 0 : i64, scratch_operands = 0 : i64, tpu.core_type = #tpu.core_type<tc>, window_params = [{transform_indices = @transform_0, window_bounds = array<i64: 8, 512>}, {transform_indices = @transform_1, window_bounds = array<i64: 8, 512>}]} {
    %c0 = arith.constant 0 : index
    %c0_0 = arith.constant 0 : index
    %0 = vector.load %arg1[%c0, %c0_0] : memref<8x512xf32, #tpu.memory_space<vmem>>, vector<8x512xf32>
    %1 = math.absf %0 : vector<8x512xf32>
    %cst = arith.constant 0.000000e+00 : f32
    %2 = vector.broadcast %cst : f32 to vector<8x512xf32>
    %3 = arith.subf %2, %1 : vector<8x512xf32>
    %4 = math.exp %3 : vector<8x512xf32>
    %5 = arith.mulf %4, %4 : vector<8x512xf32>
    %cst_1 = arith.constant 0.000000e+00 : f32
    %6 = vector.broadcast %cst_1 : f32 to vector<8x512xf32>
    %7 = arith.cmpf oge, %0, %6 : vector<8x512xf32>
    %cst_2 = arith.constant 2.000000e+00 : f32
    %8 = vector.broadcast %cst_2 : f32 to vector<8x512xf32>
    %9 = arith.mulf %8, %4 : vector<8x512xf32>
    %cst_3 = arith.constant 1.000000e+00 : f32
    %10 = vector.broadcast %cst_3 : f32 to vector<8x512xf32>
    %11 = arith.addf %10, %9 : vector<8x512xf32>
    %cst_4 = arith.constant 2.000000e+00 : f32
    %12 = vector.broadcast %cst_4 : f32 to vector<8x512xf32>
    %13 = arith.mulf %12, %4 : vector<8x512xf32>
    %14 = arith.addf %5, %13 : vector<8x512xf32>
    %15 = arith.select %7, %11, %14 : vector<8x512xi1>, vector<8x512xf32>
    %cst_5 = arith.constant 2.000000e+00 : f32
    %16 = vector.broadcast %cst_5 : f32 to vector<8x512xf32>
    %17 = arith.mulf %16, %5 : vector<8x512xf32>
    %cst_6 = arith.constant 2.000000e+00 : f32
    %18 = vector.broadcast %cst_6 : f32 to vector<8x512xf32>
    %19 = arith.select %7, %17, %18 : vector<8x512xi1>, vector<8x512xf32>
    %20 = arith.addf %15, %19 : vector<8x512xf32>
    %21 = tpu.reciprocal %20 {approx = true} : vector<8x512xf32> -> vector<8x512xf32>
    %22 = arith.mulf %20, %21 : vector<8x512xf32>
    %cst_7 = arith.constant 2.000000e+00 : f32
    %23 = vector.broadcast %cst_7 : f32 to vector<8x512xf32>
    %24 = arith.subf %23, %22 : vector<8x512xf32>
    %25 = arith.mulf %21, %24 : vector<8x512xf32>
    %26 = arith.mulf %0, %15 : vector<8x512xf32>
    %27 = arith.mulf %26, %25 : vector<8x512xf32>
    %c0_8 = arith.constant 0 : index
    %c0_9 = arith.constant 0 : index
    %28 = vector.load %arg2[%c0_8, %c0_9] : memref<8x512xf32, #tpu.memory_space<vmem>>, vector<8x512xf32>
    tpu.vector_store %arg2[%c0_8, %c0_9], %27 {strides = array<i32>} : memref<8x512xf32, #tpu.memory_space<vmem>>, vector<8x512xf32>,
    return
  }
  func.func @transform_0(%arg0: i32) -> (i32, i32) {
    %c0_i32 = arith.constant 0 : i32
    %c0_i32_0 = arith.constant 0 : i32
    return %arg0, %c0_i32 : i32, i32
  }
  func.func @transform_1(%arg0: i32) -> (i32, i32) {
    %c0_i32 = arith.constant 0 : i32
    %c0_i32_0 = arith.constant 0 : i32
    return %arg0, %c0_i32 : i32, i32
  }
}

</mosaic_0001>

<llo_original>
// kernel: mish.1
$region0: #{mish.1}
  #allocation0 [shape = 'u32[]', space=smem, size = 0x4, offset = 0x4, fixed_abs, tag = 'smem constant byte address 0x4 - core index']
  #allocation1 [shape = 'u32[144,128]{1,0:T(1,128)}', space=vmem, size = 0x12000, scoped, tag = 'internal scratch']
  %s0 = inlined_call_operand.vmem [shape: f32[8,512], index: 0, kind: input, shape index: {}]
  %s1 = inlined_call_operand.vmem [shape: f32[8,512], index: 1, kind: output, shape index: {}]
  %s2 = sld [smem:[#allocation0]]
  $region14: #{mish.1} parent=0
    _
  %s4 = ssub.s32 1, %s2
  %s5 = scalar_select 0, %s4, %s2
  // Predicated region
  $region2: #{mish.1} parent=0 // pred_check
    _
  $region3: #{mish.1} parent=0 // pred_check_branch
    %7 = sbr.rel (0) target = $region5
  $region4: #{mish.1} parent=0 // pred_region
    _
  $region5: #{mish.1} parent=0 // pred_fallthru
    _
  %v8 = vld [vmem:[%s0] sm:$0xff]
  %v9 = vld [vmem:[%s0 + $0x8] sm:$0xff]
  %v10 = vld [vmem:[%s0 + $0x10] sm:$0xff]
  %v11 = vld [vmem:[%s0 + $0x18] sm:$0xff]
  %v12 = vand.u32 2147483647, %v8
  %v13 = vand.u32 2147483647, %v9
  %v14 = vand.u32 2147483647, %v10
  %v15 = vand.u32 2147483647, %v11
  %v16 = vsub.f32 0.0, %v12
  %v17 = vsub.f32 0.0, %v13
  %v18 = vsub.f32 0.0, %v14
  %v19 = vsub.f32 0.0, %v15
  %v20 = vmul.f32 %v16, 1.442695
  %v21 = vpow.pop %v20
  %v22 = vmul.f32 %v17, 1.442695
  %v23 = vpow.pop %v22
  %v24 = vmul.f32 %v18, 1.442695
  %v25 = vpow.pop %v24
  %v26 = vmul.f32 %v19, 1.442695
  %v27 = vpow.pop %v26
  %v28 = vmul.f32 %v21, %v21
  %v29 = vmul.f32 %v23, %v23
  %v30 = vmul.f32 %v25, %v25
  %v31 = vmul.f32 %v27, %v27
  %vm32 = vcmp.ge.f32.partialorder %v8, 0.0
  %vm33 = vcmp.ge.f32.partialorder %v9, 0.0
  %vm34 = vcmp.ge.f32.partialorder %v10, 0.0
  %vm35 = vcmp.ge.f32.partialorder %v11, 0.0
  %v36 = vmul.f32 %v21, 2.0
  %v37 = vmul.f32 %v23, 2.0
  %v38 = vmul.f32 %v25, 2.0
  %v39 = vmul.f32 %v27, 2.0
  %v40 = vadd.f32 %v36, 1.0
  %v41 = vadd.f32 %v37, 1.0
  %v42 = vadd.f32 %v38, 1.0
  %v43 = vadd.f32 %v39, 1.0
  %v44 = vadd.f32 %v28, %v36
  %v45 = vadd.f32 %v29, %v37
  %v46 = vadd.f32 %v30, %v38
  %v47 = vadd.f32 %v31, %v39
  %v48 = vsel %vm32, %v40, %v44
  %v49 = vsel %vm33, %v41, %v45
  %v50 = vsel %vm34, %v42, %v46
  %v51 = vsel %vm35, %v43, %v47
  %v52 = vmul.f32 %v28, 2.0
  %v53 = vmul.f32 %v29, 2.0
  %v54 = vmul.f32 %v30, 2.0
  %v55 = vmul.f32 %v31, 2.0
  %v56 = vsel %vm32, %v52, 2.0
  %v57 = vsel %vm33, %v53, 2.0
  %v58 = vsel %vm34, %v54, 2.0
  %v59 = vsel %vm35, %v55, 2.0
  %v60 = vadd.f32 %v48, %v56
  %v61 = vadd.f32 %v49, %v57
  %v62 = vadd.f32 %v50, %v58
  %v63 = vadd.f32 %v51, %v59
  %v64 = vrcp.pop %v60
  %v65 = vrcp.pop %v61
  %v66 = vrcp.pop %v62
  %v67 = vrcp.pop %v63
  %v68 = vmul.f32 %v60, %v64
  %v69 = vmul.f32 %v61, %v65
  %v70 = vmul.f32 %v62, %v66
  %v71 = vmul.f32 %v63, %v67
  %v72 = vsub.f32 2.0, %v68
  %v73 = vsub.f32 2.0, %v69
  %v74 = vsub.f32 2.0, %v70
  %v75 = vsub.f32 2.0, %v71
  %v76 = vmul.f32 %v64, %v72
  %v77 = vmul.f32 %v65, %v73
  %v78 = vmul.f32 %v66, %v74
  %v79 = vmul.f32 %v67, %v75
  %v80 = vmul.f32 %v8, %v48
  %v81 = vmul.f32 %v9, %v49
  %v82 = vmul.f32 %v10, %v50
  %v83 = vmul.f32 %v11, %v51
  %v84 = vmul.f32 %v80, %v76
  %v85 = vmul.f32 %v81, %v77
  %v86 = vmul.f32 %v82, %v78
  %v87 = vmul.f32 %v83, %v79
  %88 = vst [vmem:[%s1] sm:$0xff] %v84
  %89 = vst [vmem:[%s1 + $0x8] sm:$0xff] %v85
  %90 = vst [vmem:[%s1 + $0x10] sm:$0xff] %v86
  %91 = vst [vmem:[%s1 + $0x18] sm:$0xff] %v87
  // Predicated region
  $region6: #{mish.1} parent=0 // pred_check
    _
  $region7: #{mish.1} parent=0 // pred_check_branch
    %93 = sbr.rel (0) target = $region9
  $region8: #{mish.1} parent=0 // pred_region
    _
  $region9: #{mish.1} parent=0 // pred_fallthru
    _
  // Predicated region
  $region10: #{mish.1} parent=0 // pred_check
    _
  $region11: #{mish.1} parent=0 // pred_check_branch
    %95 = sbr.rel (0) target = $region13
  $region12: #{mish.1} parent=0 // pred_region
    _
  $region13: #{mish.1} parent=0 // pred_fallthru
    _

</llo_original>
